<compile_context>
chip_gen: v7x
topology: tpu7x:2x2x1
jax: 0.10.0
libtpu: 0.0.40
codegen_flags: <defaults>
</compile_context>

<pallas_src>
import jax
import jax.numpy as jnp
from jax.experimental import pallas as pl
from jax.experimental.pallas import tpu as pltpu

BN_EPS = 1e-5
LANE = 128

# Static indices into the packed stacks.
W_L1, W_L2 = 0, 1                     # (2, Dp, Dp) weight stack
V_G1, V_B1, V_G2, V_B2 = 0, 1, 2, 3   # (4, 1, Dp) BN gamma/beta stack


def _bn_train(h, gamma, beta):
    """Training-mode BatchNorm1d in scale/shift form.

    var = E[h^2] - mu^2 lets both batch reductions issue back-to-back; gamma and
    rsqrt fold into a (1, d) scale, so per-element cost is one mul + add.
    """
    mu = jnp.mean(h, axis=0, keepdims=True)          # (1, d)
    ex2 = jnp.mean(h * h, axis=0, keepdims=True)     # (1, d)
    var = jnp.maximum(ex2 - mu * mu, 0.0)            # guard tiny negative cancellation
    scale = gamma * jax.lax.rsqrt(var + BN_EPS)      # (1, d)
    shift = beta - mu * scale                        # (1, d)
    return h * scale + shift


def ln_block_kernel(x_ref, w_ref, vec_ref, out_ref):
    x = x_ref[...]

    # Linear1 (bias dropped: cancels with batch mean) -> BN -> ReLU
    h = jnp.dot(x, w_ref[W_L1], preferred_element_type=jnp.float32)
    h = _bn_train(h, vec_ref[V_G1], vec_ref[V_B1])
    h = jnp.maximum(h, 0.0)

    # Linear2 (bias dropped) -> BN
    h = jnp.dot(h, w_ref[W_L2], preferred_element_type=jnp.float32)
    h = _bn_train(h, vec_ref[V_G2], vec_ref[V_B2])

    # Residual + ReLU; lane-dense, unmasked store.
    out_ref[...] = jnp.maximum(h + x, 0.0)


def ln_block_forward(x, params):
    batch, dim = x.shape
    dpad = pl.cdiv(dim, LANE) * LANE  # lane-dense feature axis

    def pad_mat(w):
        return jnp.zeros((dpad, dpad), jnp.float32).at[:dim, :dim].set(w)

    def pad_vec(v):
        return jnp.zeros((1, dpad), jnp.float32).at[:, :dim].set(v)

    # Pack parameters to minimize input DMA count (8 arrays -> 2).
    w_packed = jnp.stack([pad_mat(params["w1"]), pad_mat(params["w2"])])      # (2, Dp, Dp)
    vec_packed = jnp.stack(
        [pad_vec(params["g1"]), pad_vec(params["b1"]),
         pad_vec(params["g2"]), pad_vec(params["b2"])])                       # (4, 1, Dp)
    x_padded = jnp.zeros((batch, dpad), jnp.float32).at[:, :dim].set(x)

    vmem = pl.BlockSpec(memory_space=pltpu.MemorySpace.VMEM)
    out_padded = pl.pallas_call(
        ln_block_kernel,
        out_shape=jax.ShapeDtypeStruct((batch, dpad), jnp.float32),
        in_specs=[vmem, vmem, vmem],
        out_specs=vmem,
    )(x_padded, w_packed, vec_packed)
    return out_padded[:, :dim]


ln_block_forward_jit = jax.jit(ln_block_forward)


def ln_block_reference(x, p):
    """Pure-JAX reference matching the PyTorch module exactly (Linear biases
    included, textbook BN form) — validates the bias-drop + var-rewrite + padding."""

    def bn(h, g, b):
        mu = jnp.mean(h, axis=0, keepdims=True)
        var = jnp.mean((h - mu) ** 2, axis=0, keepdims=True)
        return (h - mu) / jnp.sqrt(var + BN_EPS) * g + b

    h = jnp.maximum(bn(x @ p["w1"] + p["bl1"], p["g1"], p["b1"]), 0.0)
    h = bn(h @ p["w2"] + p["bl2"], p["g2"], p["b2"])
    return jnp.maximum(h + x, 0.0)


def init_params(key, dim):
    ks = iter(jax.random.split(key, 8))

    def lin_params(din, dout):
        scale = 1.0 / jnp.sqrt(din)
        w = jax.random.uniform(next(ks), (din, dout), jnp.float32, -scale, scale)
        b = jax.random.uniform(next(ks), (1, dout), jnp.float32, -scale, scale)
        return w, b

    def bn_params(d):
        g = 1.0 + 0.1 * jax.random.normal(next(ks), (1, d), jnp.float32)
        b = 0.1 * jax.random.normal(next(ks), (1, d), jnp.float32)
        return g, b

    p = {}
    p["w1"], p["bl1"] = lin_params(dim, dim)   # weight stored (in, out); bias unused by kernel
    p["g1"], p["b1"] = bn_params(dim)
    p["w2"], p["bl2"] = lin_params(dim, dim)
    p["g2"], p["b2"] = bn_params(dim)
    return p


if __name__ == "__main__":
    # Small shapes: the residual forces dim_in == dim_out; use batch=16, dim=32.
    batch, dim = 16, 32

    key = jax.random.PRNGKey(0)
    kx, kp = jax.random.split(key)
    x = jax.random.normal(kx, (batch, dim), jnp.float32)
    params = init_params(kp, dim)

    out = jax.block_until_ready(ln_block_forward_jit(x, params))
    ref = ln_block_reference(x, params)

    assert out.shape == (batch, dim)
    assert jnp.allclose(out, ref, atol=1e-4, rtol=1e-4), "mismatch vs reference"
    print("KERNEL_OK")
</pallas_src>

<mosaic_0001>
module attributes {stable_mosaic.version = 11 : i64} {
  func.func @ln_block_kernel(%arg0: memref<16x128xf32, #tpu.memory_space<vmem>>, %arg1: memref<2x128x128xf32, #tpu.memory_space<vmem>>, %arg2: memref<4x1x128xf32, #tpu.memory_space<vmem>>, %arg3: memref<16x128xf32, #tpu.memory_space<vmem>>) attributes {dimension_semantics = [], scalar_prefetch = 0 : i64, scratch_operands = 0 : i64, tpu.core_type = #tpu.core_type<tc>} {
    %c0 = arith.constant 0 : index
    %c0_0 = arith.constant 0 : index
    %0 = vector.load %arg0[%c0, %c0_0] : memref<16x128xf32, #tpu.memory_space<vmem>>, vector<16x128xf32>
    %c0_1 = arith.constant 0 : index
    %c0_2 = arith.constant 0 : index
    %c0_3 = arith.constant 0 : index
    %1 = vector.load %arg1[%c0_1, %c0_2, %c0_3] : memref<2x128x128xf32, #tpu.memory_space<vmem>>, vector<1x128x128xf32>
    %2 = vector.shape_cast %1 : vector<1x128x128xf32> to vector<128x128xf32>
    %cst = arith.constant dense<0.000000e+00> : vector<16x128xf32>
    %3 = tpu.matmul %0, %2, %cst {dimension_numbers = #tpu.dot_dimension_numbers<[1], [0], [0], [1], [0, 0, 1, 1], [], []>} : vector<16x128xf32>, vector<128x128xf32>, vector<16x128xf32> -> vector<16x128xf32>
    %c0_4 = arith.constant 0 : index
    %c0_5 = arith.constant 0 : index
    %c0_6 = arith.constant 0 : index
    %4 = vector.load %arg2[%c0_4, %c0_5, %c0_6] : memref<4x1x128xf32, #tpu.memory_space<vmem>>, vector<1x1x128xf32>
    %5 = vector.shape_cast %4 : vector<1x1x128xf32> to vector<1x128xf32>
    %c1 = arith.constant 1 : index
    %c0_7 = arith.constant 0 : index
    %c0_8 = arith.constant 0 : index
    %6 = vector.load %arg2[%c1, %c0_7, %c0_8] : memref<4x1x128xf32, #tpu.memory_space<vmem>>, vector<1x1x128xf32>
    %7 = vector.shape_cast %6 : vector<1x1x128xf32> to vector<1x128xf32>
    %cst_9 = arith.constant dense<0.000000e+00> : vector<128xf32>
    %8 = vector.multi_reduction <add>, %3, %cst_9 [0] : vector<16x128xf32> to vector<128xf32>
    %9 = vector.shape_cast %8 : vector<128xf32> to vector<1x128xf32>
    %cst_10 = arith.constant 1.600000e+01 : f32
    %10 = vector.broadcast %cst_10 : f32 to vector<1x128xf32>
    %11 = arith.divf %9, %10 : vector<1x128xf32>
    %12 = arith.mulf %3, %3 : vector<16x128xf32>
    %cst_11 = arith.constant dense<0.000000e+00> : vector<128xf32>
    %13 = vector.multi_reduction <add>, %12, %cst_11 [0] : vector<16x128xf32> to vector<128xf32>
    %14 = vector.shape_cast %13 : vector<128xf32> to vector<1x128xf32>
    %cst_12 = arith.constant 1.600000e+01 : f32
    %15 = vector.broadcast %cst_12 : f32 to vector<1x128xf32>
    %16 = arith.divf %14, %15 : vector<1x128xf32>
    %17 = arith.mulf %11, %11 : vector<1x128xf32>
    %18 = arith.subf %16, %17 : vector<1x128xf32>
    %cst_13 = arith.constant 0.000000e+00 : f32
    %19 = vector.broadcast %cst_13 : f32 to vector<1x128xf32>
    %20 = arith.maximumf %18, %19 : vector<1x128xf32>
    %cst_14 = arith.constant 9.99999974E-6 : f32
    %21 = vector.broadcast %cst_14 : f32 to vector<1x128xf32>
    %22 = arith.addf %20, %21 : vector<1x128xf32>
    %23 = math.rsqrt %22 : vector<1x128xf32>
    %24 = arith.mulf %5, %23 : vector<1x128xf32>
    %25 = arith.mulf %11, %24 : vector<1x128xf32>
    %26 = arith.subf %7, %25 : vector<1x128xf32>
    %27 = vector.broadcast %24 : vector<1x128xf32> to vector<16x128xf32>
    %28 = arith.mulf %3, %27 : vector<16x128xf32>
    %29 = vector.broadcast %26 : vector<1x128xf32> to vector<16x128xf32>
    %30 = arith.addf %28, %29 : vector<16x128xf32>
    %cst_15 = arith.constant 0.000000e+00 : f32
    %31 = vector.broadcast %cst_15 : f32 to vector<16x128xf32>
    %32 = arith.maximumf %30, %31 : vector<16x128xf32>
    %c1_16 = arith.constant 1 : index
    %c0_17 = arith.constant 0 : index
    %c0_18 = arith.constant 0 : index
    %33 = vector.load %arg1[%c1_16, %c0_17, %c0_18] : memref<2x128x128xf32, #tpu.memory_space<vmem>>, vector<1x128x128xf32>
    %34 = vector.shape_cast %33 : vector<1x128x128xf32> to vector<128x128xf32>
    %cst_19 = arith.constant dense<0.000000e+00> : vector<16x128xf32>
    %35 = tpu.matmul %32, %34, %cst_19 {dimension_numbers = #tpu.dot_dimension_numbers<[1], [0], [0], [1], [0, 0, 1, 1], [], []>} : vector<16x128xf32>, vector<128x128xf32>, vector<16x128xf32> -> vector<16x128xf32>
    %c2 = arith.constant 2 : index
    %c0_20 = arith.constant 0 : index
    %c0_21 = arith.constant 0 : index
    %36 = vector.load %arg2[%c2, %c0_20, %c0_21] : memref<4x1x128xf32, #tpu.memory_space<vmem>>, vector<1x1x128xf32>
    %37 = vector.shape_cast %36 : vector<1x1x128xf32> to vector<1x128xf32>
    %c3 = arith.constant 3 : index
    %c0_22 = arith.constant 0 : index
    %c0_23 = arith.constant 0 : index
    %38 = vector.load %arg2[%c3, %c0_22, %c0_23] : memref<4x1x128xf32, #tpu.memory_space<vmem>>, vector<1x1x128xf32>
    %39 = vector.shape_cast %38 : vector<1x1x128xf32> to vector<1x128xf32>
    %cst_24 = arith.constant dense<0.000000e+00> : vector<128xf32>
    %40 = vector.multi_reduction <add>, %35, %cst_24 [0] : vector<16x128xf32> to vector<128xf32>
    %41 = vector.shape_cast %40 : vector<128xf32> to vector<1x128xf32>
    %cst_25 = arith.constant 1.600000e+01 : f32
    %42 = vector.broadcast %cst_25 : f32 to vector<1x128xf32>
    %43 = arith.divf %41, %42 : vector<1x128xf32>
    %44 = arith.mulf %35, %35 : vector<16x128xf32>
    %cst_26 = arith.constant dense<0.000000e+00> : vector<128xf32>
    %45 = vector.multi_reduction <add>, %44, %cst_26 [0] : vector<16x128xf32> to vector<128xf32>
    %46 = vector.shape_cast %45 : vector<128xf32> to vector<1x128xf32>
    %cst_27 = arith.constant 1.600000e+01 : f32
    %47 = vector.broadcast %cst_27 : f32 to vector<1x128xf32>
    %48 = arith.divf %46, %47 : vector<1x128xf32>
    %49 = arith.mulf %43, %43 : vector<1x128xf32>
    %50 = arith.subf %48, %49 : vector<1x128xf32>
    %cst_28 = arith.constant 0.000000e+00 : f32
    %51 = vector.broadcast %cst_28 : f32 to vector<1x128xf32>
    %52 = arith.maximumf %50, %51 : vector<1x128xf32>
    %cst_29 = arith.constant 9.99999974E-6 : f32
    %53 = vector.broadcast %cst_29 : f32 to vector<1x128xf32>
    %54 = arith.addf %52, %53 : vector<1x128xf32>
    %55 = math.rsqrt %54 : vector<1x128xf32>
    %56 = arith.mulf %37, %55 : vector<1x128xf32>
    %57 = arith.mulf %43, %56 : vector<1x128xf32>
    %58 = arith.subf %39, %57 : vector<1x128xf32>
    %59 = vector.broadcast %56 : vector<1x128xf32> to vector<16x128xf32>
    %60 = arith.mulf %35, %59 : vector<16x128xf32>
    %61 = vector.broadcast %58 : vector<1x128xf32> to vector<16x128xf32>
    %62 = arith.addf %60, %61 : vector<16x128xf32>
    %63 = arith.addf %62, %0 : vector<16x128xf32>
    %cst_30 = arith.constant 0.000000e+00 : f32
    %64 = vector.broadcast %cst_30 : f32 to vector<16x128xf32>
    %65 = arith.maximumf %63, %64 : vector<16x128xf32>
    %c0_31 = arith.constant 0 : index
    %c0_32 = arith.constant 0 : index
    %66 = vector.load %arg3[%c0_31, %c0_32] : memref<16x128xf32, #tpu.memory_space<vmem>>, vector<16x128xf32>
    tpu.vector_store %arg3[%c0_31, %c0_32], %65 {strides = array<i32>} : memref<16x128xf32, #tpu.memory_space<vmem>>, vector<16x128xf32>,
    return
  }
}

</mosaic_0001>

<llo_original>
// kernel: ln_block_forward.1
$region0: #{ln_block_forward.1}
  #allocation0 [shape = 'u32[]', space=smem, size = 0x4, offset = 0x4, fixed_abs, tag = 'smem constant byte address 0x4 - core index']
  #allocation1 [shape = 'u32[144,128]{1,0:T(1,128)}', space=vmem, size = 0x12000, scoped, tag = 'internal scratch']
  %s0 = inlined_call_operand.vmem [shape: f32[16,128], index: 0, kind: input, shape index: {}]
  %s1 = inlined_call_operand.vmem [shape: f32[2,128,128], index: 1, kind: input, shape index: {}]
  %s2 = inlined_call_operand.vmem [shape: f32[4,1,128], index: 2, kind: input, shape index: {}]
  %s3 = inlined_call_operand.hbm [shape: f32[16,128], index: 3, kind: output, shape index: {}]
  %s4 = sld [smem:[#allocation0]]
  $region22: #{ln_block_forward.1} parent=0
    _
  %s6 = ssub.s32 1, %s4
  %s7 = scalar_select 0, %s6, %s4
  $region1: #{ln_block_forward.1} parent=0
    #allocation2 [shape = 'u8[8192]{0}', space=vmem, size = 0x2000, scoped, tag = 'output window, operand 0, single buffered']
    #allocation3 [shape = 's32[1]{0}', space=sflag, size = 0x4, scoped, tag = 'scoped memory for ln_block_forward.1']
    %8 = vsyncpa [#allocation3], 0
    // Predicated region
    $region2: #{ln_block_forward.1} parent=1 // pred_check
      _
    $region3: #{ln_block_forward.1} parent=1 // pred_check_branch
      %10 = sbr.rel (0) target = $region5
    $region4: #{ln_block_forward.1} parent=1 // pred_region
      _
    $region5: #{ln_block_forward.1} parent=1 // pred_fallthru
      _
    // Predicated region
    $region6: #{ln_block_forward.1} parent=1 // pred_check
      _
    $region7: #{ln_block_forward.1} parent=1 // pred_check_branch
      %12 = sbr.rel (0) target = $region9
    $region8: #{ln_block_forward.1} parent=1 // pred_region
      _
    $region9: #{ln_block_forward.1} parent=1 // pred_fallthru
      _
    // Predicated region
    $region10: #{ln_block_forward.1} parent=1 // pred_check
      _
    $region11: #{ln_block_forward.1} parent=1 // pred_check_branch
      %14 = sbr.rel (0) target = $region13
    $region12: #{ln_block_forward.1} parent=1 // pred_region
      _
    $region13: #{ln_block_forward.1} parent=1 // pred_fallthru
      _
    %v15 = vld [vmem:[%s0] sm:$0xff]
    %v16 = vld [vmem:[%s0 + $0x8] sm:$0xff]
    %v17 = vld [vmem:[%s1] sm:$0xff]
    %v18 = vld [vmem:[%s1 + $0x8] sm:$0xff]
    %v19 = vld [vmem:[%s1 + $0x10] sm:$0xff]
    %v20 = vld [vmem:[%s1 + $0x18] sm:$0xff]
    %v21 = vld [vmem:[%s1 + $0x20] sm:$0xff]
    %v22 = vld [vmem:[%s1 + $0x28] sm:$0xff]
    %v23 = vld [vmem:[%s1 + $0x30] sm:$0xff]
    %v24 = vld [vmem:[%s1 + $0x38] sm:$0xff]
    %v25 = vld [vmem:[%s1 + $0x40] sm:$0xff]
    %v26 = vld [vmem:[%s1 + $0x48] sm:$0xff]
    %v27 = vld [vmem:[%s1 + $0x50] sm:$0xff]
    %v28 = vld [vmem:[%s1 + $0x58] sm:$0xff]
    %v29 = vld [vmem:[%s1 + $0x60] sm:$0xff]
    %v30 = vld [vmem:[%s1 + $0x68] sm:$0xff]
    %v31 = vld [vmem:[%s1 + $0x70] sm:$0xff]
    %v32 = vld [vmem:[%s1 + $0x78] sm:$0xff]
    %33 = vmatprep.subr.mxu0 0.0
    %34 = vmatpush1.msra.mxu0 %v17
    %35 = vmatprep.subr.mxu0 0.0
    %36 = vmatpush1.msra.mxu0 %v18
    %37 = vmatprep.subr.mxu0 0.0
    %38 = vmatpush1.msra.mxu0 %v19
    %39 = vmatprep.subr.mxu0 0.0
    %40 = vmatpush1.msra.mxu0 %v20
    %41 = vmatprep.subr.mxu0 0.0
    %42 = vmatpush1.msra.mxu0 %v21
    %43 = vmatprep.subr.mxu0 0.0
    %44 = vmatpush1.msra.mxu0 %v22
    %45 = vmatprep.subr.mxu0 0.0
    %46 = vmatpush1.msra.mxu0 %v23
    %47 = vmatprep.subr.mxu0 0.0
    %48 = vmatpush1.msra.mxu0 %v24
    %49 = vmatprep.subr.mxu0 0.0
    %50 = vmatpush1.msra.mxu0 %v25
    %51 = vmatprep.subr.mxu0 0.0
    %52 = vmatpush1.msra.mxu0 %v26
    %53 = vmatprep.subr.mxu0 0.0
    %54 = vmatpush1.msra.mxu0 %v27
    %55 = vmatprep.subr.mxu0 0.0
    %56 = vmatpush1.msra.mxu0 %v28
    %57 = vmatprep.subr.mxu0 0.0
    %58 = vmatpush1.msra.mxu0 %v29
    %59 = vmatprep.subr.mxu0 0.0
    %60 = vmatpush1.msra.mxu0 %v30
    %61 = vmatprep.subr.mxu0 0.0
    %62 = vmatpush1.msra.mxu0 %v31
    %63 = vmatprep.subr.mxu0 0.0
    %64 = vmatpush1.msra.mxu0 %v32
    %65 = vmatprep.subr.mxu0 0.0
    %66 = vmatpush1.msra.mxu0 0.0
    %67 = vmatprep.subr.mxu0 0.0
    %68 = vmatpush1.msra.mxu0 0.0
    %69 = vmatprep.subr.mxu0 0.0
    %70 = vmatpush1.msra.mxu0 0.0
    %71 = vmatprep.subr.mxu0 0.0
    %72 = vmatpush1.msra.mxu0 0.0
    %73 = vmatprep.subr.mxu0 0.0
    %74 = vmatpush1.msra.mxu0 0.0
    %75 = vmatprep.subr.mxu0 0.0
    %76 = vmatpush1.msra.mxu0 0.0
    %77 = vmatprep.subr.mxu0 0.0
    %78 = vmatpush1.msra.mxu0 0.0
    %79 = vmatprep.subr.mxu0 0.0
    %80 = vmatpush1.msra.mxu0 0.0
    %81 = vmatprep.subr.mxu0 0.0
    %82 = vmatpush1.msra.mxu0 0.0
    %83 = vmatprep.subr.mxu0 0.0
    %84 = vmatpush1.msra.mxu0 0.0
    %85 = vmatprep.subr.mxu0 0.0
    %86 = vmatpush1.msra.mxu0 0.0
    %87 = vmatprep.subr.mxu0 0.0
    %88 = vmatpush1.msra.mxu0 0.0
    %89 = vmatprep.subr.mxu0 0.0
    %90 = vmatpush1.msra.mxu0 0.0
    %91 = vmatprep.subr.mxu0 0.0
    %92 = vmatpush1.msra.mxu0 0.0
    %93 = vmatprep.subr.mxu0 0.0
    %94 = vmatpush1.msra.mxu0 0.0
    %95 = vmatprep.subr.mxu0 0.0
    %96 = vmatpush1.msra.mxu0 0.0
    %97 = vmatprep.mubr.f32.mxu0 0.0
    %98 = vmatmul.mubr.f32.gmra.mrb[0].mxu0 %v15
    %v99 = vpop.f32.mrb[0].mxu0
    %v100 = vadd.f32 0.0, %v99
    %v101 = vpop.f32.mrb[0].mxu0
    %102 = vmatprep.mubr.f32.mxu0 0.0
    %103 = vmatmul.mubr.f32.gmra.mrb[0].mxu0 %v16
    %v104 = vpop.f32.mrb[0].mxu0
    %v105 = vadd.f32 0.0, %v104
    %v106 = vpop.f32.mrb[0].mxu0
    %107 = vdwg.mxu0
    %v108 = vld [vmem:[%s2] sm:$0x1]
    %s109 = scalar_lea.vmem %s2, 1
    %v110 = vld [vmem:[%s109] sm:$0x1]
    %v111 = vadd.f32 %v100, %v105
    %v112 = vrot.slane %v111, 4
    %v113 = vadd.f32 %v111, %v112
    %v114 = vrot.slane %v113, 2
    %v115 = vadd.f32 %v113, %v114
    %v116 = vrot.slane %v115, 1
    %v117 = vadd.f32 %v115, %v116
    %v118 = vrcp.pop 16.0
    %v119 = vmul.f32 %v117, %v118
    %v120 = vmul.f32 %v100, %v100
    %v121 = vmul.f32 %v105, %v105
    %v122 = vadd.f32 %v120, %v121
    %v123 = vrot.slane %v122, 4
    %v124 = vadd.f32 %v122, %v123
    %v125 = vrot.slane %v124, 2
    %v126 = vadd.f32 %v124, %v125
    %v127 = vrot.slane %v126, 1
    %v128 = vadd.f32 %v126, %v127
    %v129 = vmul.f32 %v128, %v118
    %v130 = vmul.f32 %v119, %v119
    %v131 = vsub.f32 %v129, %v130
    %v132 = vmax.f32 %v131, 0.0
    %v133 = vadd.f32 %v132, 1e-05
    %v134 = vrsqrt.pop %v133
    %v135 = vmul.f32 %v108, %v134
    %v136 = vmul.f32 %v119, %v135
    %v137 = vsub.f32 %v110, %v136
    %v139 = vlaneseq
    %v140 = vshrl.u32 %v139, 7
    %v141 = vsub.s32 0, %v140
    %v142 = vrot.slane %v135, %v141
    %v144 = vmul.f32 %v100, %v142
    %v145 = vmul.f32 %v105, %v142
    %v147 = vlaneseq
    %v148 = vshrl.u32 %v147, 7
    %v149 = vsub.s32 0, %v148
    %v150 = vrot.slane %v137, %v149
    %v152 = vadd.f32 %v144, %v150
    %v153 = vadd.f32 %v145, %v150
    %v154 = vmax.f32 %v152, 0.0
    %v155 = vmax.f32 %v153, 0.0
    %s156 = scalar_lea.vmem %s1, 128
    %v157 = vld [vmem:[%s156] sm:$0xff]
    %v158 = vld [vmem:[%s156 + $0x8] sm:$0xff]
    %v159 = vld [vmem:[%s156 + $0x10] sm:$0xff]
    %v160 = vld [vmem:[%s156 + $0x18] sm:$0xff]
    %v161 = vld [vmem:[%s156 + $0x20] sm:$0xff]
    %v162 = vld [vmem:[%s156 + $0x28] sm:$0xff]
    %v163 = vld [vmem:[%s156 + $0x30] sm:$0xff]
    %v164 = vld [vmem:[%s156 + $0x38] sm:$0xff]
    %v165 = vld [vmem:[%s156 + $0x40] sm:$0xff]
    %v166 = vld [vmem:[%s156 + $0x48] sm:$0xff]
    %v167 = vld [vmem:[%s156 + $0x50] sm:$0xff]
    %v168 = vld [vmem:[%s156 + $0x58] sm:$0xff]
    %v169 = vld [vmem:[%s156 + $0x60] sm:$0xff]
    %v170 = vld [vmem:[%s156 + $0x68] sm:$0xff]
    %v171 = vld [vmem:[%s156 + $0x70] sm:$0xff]
    %v172 = vld [vmem:[%s156 + $0x78] sm:$0xff]
    %173 = vmatprep.subr.mxu0 0.0
    %174 = vmatpush1.msra.mxu0 %v157
    %175 = vmatprep.subr.mxu0 0.0
    %176 = vmatpush1.msra.mxu0 %v158
    %177 = vmatprep.subr.mxu0 0.0
    %178 = vmatpush1.msra.mxu0 %v159
    %179 = vmatprep.subr.mxu0 0.0
    %180 = vmatpush1.msra.mxu0 %v160
    %181 = vmatprep.subr.mxu0 0.0
    %182 = vmatpush1.msra.mxu0 %v161
    %183 = vmatprep.subr.mxu0 0.0
    %184 = vmatpush1.msra.mxu0 %v162
    %185 = vmatprep.subr.mxu0 0.0
    %186 = vmatpush1.msra.mxu0 %v163
    %187 = vmatprep.subr.mxu0 0.0
    %188 = vmatpush1.msra.mxu0 %v164
    %189 = vmatprep.subr.mxu0 0.0
    %190 = vmatpush1.msra.mxu0 %v165
    %191 = vmatprep.subr.mxu0 0.0
    %192 = vmatpush1.msra.mxu0 %v166
    %193 = vmatprep.subr.mxu0 0.0
    %194 = vmatpush1.msra.mxu0 %v167
    %195 = vmatprep.subr.mxu0 0.0
    %196 = vmatpush1.msra.mxu0 %v168
    %197 = vmatprep.subr.mxu0 0.0
    %198 = vmatpush1.msra.mxu0 %v169
    %199 = vmatprep.subr.mxu0 0.0
    %200 = vmatpush1.msra.mxu0 %v170
    %201 = vmatprep.subr.mxu0 0.0
    %202 = vmatpush1.msra.mxu0 %v171
    %203 = vmatprep.subr.mxu0 0.0
    %204 = vmatpush1.msra.mxu0 %v172
    %205 = vmatprep.subr.mxu0 0.0
    %206 = vmatpush1.msra.mxu0 0.0
    %207 = vmatprep.subr.mxu0 0.0
    %208 = vmatpush1.msra.mxu0 0.0
    %209 = vmatprep.subr.mxu0 0.0
    %210 = vmatpush1.msra.mxu0 0.0
    %211 = vmatprep.subr.mxu0 0.0
    %212 = vmatpush1.msra.mxu0 0.0
    %213 = vmatprep.subr.mxu0 0.0
    %214 = vmatpush1.msra.mxu0 0.0
    %215 = vmatprep.subr.mxu0 0.0
    %216 = vmatpush1.msra.mxu0 0.0
    %217 = vmatprep.subr.mxu0 0.0
    %218 = vmatpush1.msra.mxu0 0.0
    %219 = vmatprep.subr.mxu0 0.0
    %220 = vmatpush1.msra.mxu0 0.0
    %221 = vmatprep.subr.mxu0 0.0
    %222 = vmatpush1.msra.mxu0 0.0
    %223 = vmatprep.subr.mxu0 0.0
    %224 = vmatpush1.msra.mxu0 0.0
    %225 = vmatprep.subr.mxu0 0.0
    %226 = vmatpush1.msra.mxu0 0.0
    %227 = vmatprep.subr.mxu0 0.0
    %228 = vmatpush1.msra.mxu0 0.0
    %229 = vmatprep.subr.mxu0 0.0
    %230 = vmatpush1.msra.mxu0 0.0
    %231 = vmatprep.subr.mxu0 0.0
    %232 = vmatpush1.msra.mxu0 0.0
    %233 = vmatprep.subr.mxu0 0.0
    %234 = vmatpush1.msra.mxu0 0.0
    %235 = vmatprep.subr.mxu0 0.0
    %236 = vmatpush1.msra.mxu0 0.0
    %237 = vmatprep.mubr.f32.mxu0 0.0
    %238 = vmatmul.mubr.f32.gmra.mrb[0].mxu0 %v154
    %v239 = vpop.f32.mrb[0].mxu0
    %v240 = vadd.f32 0.0, %v239
    %v241 = vpop.f32.mrb[0].mxu0
    %242 = vmatprep.mubr.f32.mxu0 0.0
    %243 = vmatmul.mubr.f32.gmra.mrb[0].mxu0 %v155
    %v244 = vpop.f32.mrb[0].mxu0
    %v245 = vadd.f32 0.0, %v244
    %v246 = vpop.f32.mrb[0].mxu0
    %247 = vdwg.mxu0
    %s248 = scalar_lea.vmem %s2, 2
    %v249 = vld [vmem:[%s248] sm:$0x1]
    %s250 = scalar_lea.vmem %s2, 3
    %v251 = vld [vmem:[%s250] sm:$0x1]
    %v252 = vadd.f32 %v240, %v245
    %v253 = vrot.slane %v252, 4
    %v254 = vadd.f32 %v252, %v253
    %v255 = vrot.slane %v254, 2
    %v256 = vadd.f32 %v254, %v255
    %v257 = vrot.slane %v256, 1
    %v258 = vadd.f32 %v256, %v257
    %v259 = vmul.f32 %v258, %v118
    %v260 = vmul.f32 %v240, %v240
    %v261 = vmul.f32 %v245, %v245
    %v262 = vadd.f32 %v260, %v261
    %v263 = vrot.slane %v262, 4
    %v264 = vadd.f32 %v262, %v263
    %v265 = vrot.slane %v264, 2
    %v266 = vadd.f32 %v264, %v265
    %v267 = vrot.slane %v266, 1
    %v268 = vadd.f32 %v266, %v267
    %v269 = vmul.f32 %v268, %v118
    %v270 = vmul.f32 %v259, %v259
    %v271 = vsub.f32 %v269, %v270
    %v272 = vmax.f32 %v271, 0.0
    %v273 = vadd.f32 %v272, 1e-05
    %v274 = vrsqrt.pop %v273
    %v275 = vmul.f32 %v249, %v274
    %v276 = vmul.f32 %v259, %v275
    %v277 = vsub.f32 %v251, %v276
    %v279 = vlaneseq
    %v280 = vshrl.u32 %v279, 7
    %v281 = vsub.s32 0, %v280
    %v282 = vrot.slane %v275, %v281
    %v284 = vmul.f32 %v240, %v282
    %v285 = vmul.f32 %v245, %v282
    %v287 = vlaneseq
    %v288 = vshrl.u32 %v287, 7
    %v289 = vsub.s32 0, %v288
    %v290 = vrot.slane %v277, %v289
    %v292 = vadd.f32 %v284, %v290
    %v293 = vadd.f32 %v285, %v290
    %v294 = vadd.f32 %v292, %v15
    %v295 = vadd.f32 %v293, %v16
    %v296 = vmax.f32 %v294, 0.0
    %v297 = vmax.f32 %v295, 0.0
    %298 = vst [vmem:[#allocation2] sm:$0xff] %v296
    %299 = vst [vmem:[#allocation2 + $0x8] sm:$0xff] %v297
    // Predicated region
    $region14: #{ln_block_forward.1} parent=1 // pred_check
      _
    $region15: #{ln_block_forward.1} parent=1 // pred_check_branch
      %301 = sbr.rel (0) target = $region17
    $region16: #{ln_block_forward.1} parent=1 // pred_region
      %s303 = ssub.s32 256, 256
      %304 = vsyncadd [#allocation3], %s303
      %s305 = sshll.u32 [#allocation2], 4
      %s306 = int_to_ptr.vmem [resolvable:$true] %s305
      %311 = dma.vmem_to_hbm [thread:$0]  %s306, 256, %s3, [#allocation3], 128, 128, 8
    $region17: #{ln_block_forward.1} parent=1 // pred_fallthru
      _
    // Predicated region
    $region18: #{ln_block_forward.1} parent=1 // pred_check
      _
    $region19: #{ln_block_forward.1} parent=1 // pred_check_branch
      %313 = sbr.rel (0) target = $region21
    $region20: #{ln_block_forward.1} parent=1 // pred_region
      %314 = dma.done [#allocation3], 256
    $region21: #{ln_block_forward.1} parent=1 // pred_fallthru
      _
    %315 = vsyncpa [#allocation3], 1

</llo_original>
